<compile_context>
chip_gen: v6e
topology: v6e:2x2x1
jax: 0.10.0
libtpu: 0.0.40
codegen_flags: <defaults>
</compile_context>

<pallas_src>
import functools

import jax
import jax.numpy as jnp
from jax import lax
from jax.experimental import pallas as pl
from jax.experimental.pallas import tpu as pltpu

_LANES = 128
_MAX_TILE_ROWS = 2048          # up to 1 MiB per (tile_rows, 128) f32 tile
_NUM_SLICES = 2                # megacore slices (v7x has 2 TCs); harmless on 1-TC chips
_BIG = 1e30


# ----------------------------------------------------------------------------
# lane-dense flattening helpers
# ----------------------------------------------------------------------------
def _tiling(n):
    """Pick (tile_rows, num_slices, tiles_per_slice, rows_padded) for n elems."""
    rows = -(-n // _LANES)
    rows8 = -(-rows // 8) * 8
    total_tiles = max(1, -(-rows8 // _MAX_TILE_ROWS))
    num_slices = _NUM_SLICES if total_tiles >= _NUM_SLICES else 1
    tiles_per_slice = -(-total_tiles // num_slices)
    total_tiles = num_slices * tiles_per_slice
    # Re-fit tile_rows so rows_padded hugs rows8 (minimal padding, big tiles).
    tile_rows = -(-rows8 // total_tiles)
    tile_rows = -(-tile_rows // 8) * 8
    rows_padded = total_tiles * tile_rows
    return tile_rows, num_slices, tiles_per_slice, rows_padded


def _lane_dense(x, rows_padded):
    flat = x.reshape(-1).astype(jnp.float32)
    pad = rows_padded * _LANES - flat.shape[0]
    if pad:                          # skip the extra HBM pass when divisible
        flat = jnp.pad(flat, (0, pad))
    return flat.reshape(rows_padded, _LANES)


# ----------------------------------------------------------------------------
# Kernel 1: masked sum / sumsq / min of gt & pred disparity (one pass)
#   out[slice, r, :] lane partials;
#   rows: 0 sum_g, 1 sumsq_g, 2 min_g, 3 sum_o, 4 sumsq_o, 5 min_o, 6-7 unused
# ----------------------------------------------------------------------------
def _moments_kernel(gt_ref, pred_ref, code_ref, out_ref, *,
                    n_valid, tile_rows, tiles_per_slice, needs_mask):
    p = pl.program_id(0)
    t = pl.program_id(1)

    @pl.when(t == 0)
    def _init():
        out_ref[...] = jnp.zeros_like(out_ref)
        big = jnp.full((1, _LANES), _BIG, jnp.float32)
        out_ref[0, 2:3, :] = big
        out_ref[0, 5:6, :] = big

    nosky = (code_ref[...] >= 1.5).astype(jnp.float32)   # code = 2*no_sky + water
    xg = gt_ref[...] * nosky
    xo = pred_ref[...] * nosky

    if needs_mask:
        # Padded tail exists: exclude it from the min (sums are safe: pad==0).
        base = (p * tiles_per_slice + t) * (tile_rows * _LANES)
        ridx = lax.broadcasted_iota(jnp.int32, (tile_rows, _LANES), 0)
        lidx = lax.broadcasted_iota(jnp.int32, (tile_rows, _LANES), 1)
        valid = (base + ridx * _LANES + lidx) < n_valid
        xg_min = jnp.where(valid, xg, _BIG)
        xo_min = jnp.where(valid, xo, _BIG)
    else:
        xg_min = xg
        xo_min = xo

    out_ref[0, 0:1, :] += jnp.sum(xg, axis=0, keepdims=True)
    out_ref[0, 1:2, :] += jnp.sum(xg * xg, axis=0, keepdims=True)
    out_ref[0, 2:3, :] = jnp.minimum(out_ref[0, 2:3, :],
                                     jnp.min(xg_min, axis=0, keepdims=True))
    out_ref[0, 3:4, :] += jnp.sum(xo, axis=0, keepdims=True)
    out_ref[0, 4:5, :] += jnp.sum(xo * xo, axis=0, keepdims=True)
    out_ref[0, 5:6, :] = jnp.minimum(out_ref[0, 5:6, :],
                                     jnp.min(xo_min, axis=0, keepdims=True))


def _masked_moments(gt2d, pr2d, code2d, n_valid, tile_rows,
                    num_slices, tiles_per_slice, needs_mask):
    kern = functools.partial(_moments_kernel,
                             n_valid=int(n_valid), tile_rows=int(tile_rows),
                             tiles_per_slice=int(tiles_per_slice),
                             needs_mask=bool(needs_mask))
    tile_spec = pl.BlockSpec((tile_rows, _LANES),
                             lambda p, t: (p * tiles_per_slice + t, 0))
    return pl.pallas_call(
        kern,
        out_shape=jax.ShapeDtypeStruct((num_slices, 8, _LANES), jnp.float32),
        grid=(num_slices, tiles_per_slice),
        in_specs=[tile_spec, tile_spec, tile_spec],
        out_specs=pl.BlockSpec((1, 8, _LANES), lambda p, t: (p, 0, 0)),
        compiler_params=pltpu.CompilerParams(
            dimension_semantics=("parallel", "arbitrary")),
    )(gt2d, pr2d, code2d)


# ----------------------------------------------------------------------------
# Kernel 2: normalisation + disp->depth + masked depth-error partial sums
#   out[slice, 8*m + k, :] lane partials; m in {water, obstacle},
#   k in {count, abs_rel, sq_rel, sq, log_sq, a1, a2, a3}
#   ("full" metrics = water + obstacle, derived in JAX)
# ----------------------------------------------------------------------------
def _depth_errors_kernel(scal_ref, gt_ref, pred_ref, code_ref, out_ref):
    t = pl.program_id(1)

    @pl.when(t == 0)
    def _init():
        out_ref[...] = jnp.zeros_like(out_ref)

    mean_g = scal_ref[0]
    istd_g = scal_ref[1]
    mean_o = scal_ref[2]
    istd_o = scal_ref[3]
    delta = scal_ref[4]
    kc = scal_ref[5]                     # fx * 0.54

    code = code_ref[...]                 # 2*no_sky + water in {0,1,2,3}
    nosky_b = code >= 1.5
    nosky_f = nosky_b.astype(jnp.float32)
    water_b = jnp.logical_or(code == 1.0, code == 3.0)

    xg = gt_ref[...] * nosky_f
    xo = pred_ref[...] * nosky_f

    # (x - mean)*inv_std - delta, clamp(0), * 255
    gtd = jnp.maximum((xg - mean_g) * istd_g - delta, 0.0) * 255.0
    prd = jnp.maximum((xo - mean_o) * istd_o - delta, 0.0) * 255.0

    # disp -> depth (kitti) with clamp to [0.001, 80]
    dg = jnp.clip(kc * pl.reciprocal(gtd + (gtd <= 0.0).astype(jnp.float32),
                                     approx=True), 0.001, 80.0)
    dp = jnp.clip(kc * pl.reciprocal(prd + (prd <= 0.0).astype(jnp.float32),
                                     approx=True), 0.001, 80.0)

    m_full = jnp.logical_and(jnp.logical_and(dg > 0.001, dg < 80.0), nosky_b)
    m_water = jnp.logical_and(m_full, water_b).astype(jnp.float32)
    m_obst = jnp.logical_and(m_full, jnp.logical_not(water_b)).astype(jnp.float32)

    inv_g = pl.reciprocal(dg, approx=True)
    inv_p = pl.reciprocal(dp, approx=True)
    diff = dg - dp
    abs_rel = jnp.abs(diff) * inv_g
    sq = diff * diff
    sq_rel = sq * inv_g
    log_d = jnp.log(dg) - jnp.log(dp)
    log_sq = log_d * log_d
    ratio = jnp.maximum(dg * inv_p, dp * inv_g)
    a1 = (ratio < 1.25).astype(jnp.float32)
    a2 = (ratio < 1.25 ** 2).astype(jnp.float32)
    a3 = (ratio < 1.25 ** 3).astype(jnp.float32)

    terms = (abs_rel, sq_rel, sq, log_sq, a1, a2, a3)
    for m, msk in enumerate((m_water, m_obst)):
        base = 8 * m
        out_ref[0, base:base + 1, :] += jnp.sum(msk, axis=0, keepdims=True)
        for k, term in enumerate(terms):
            out_ref[0, base + k + 1:base + k + 2, :] += \
                jnp.sum(term * msk, axis=0, keepdims=True)


def _masked_depth_errors(scal, gt2d, pr2d, code2d, tile_rows,
                         num_slices, tiles_per_slice):
    tile_spec = pl.BlockSpec((tile_rows, _LANES),
                             lambda p, t: (p * tiles_per_slice + t, 0))
    return pl.pallas_call(
        _depth_errors_kernel,
        out_shape=jax.ShapeDtypeStruct((num_slices, 16, _LANES), jnp.float32),
        grid=(num_slices, tiles_per_slice),
        in_specs=[pl.BlockSpec(memory_space=pltpu.MemorySpace.SMEM),
                  tile_spec, tile_spec, tile_spec],
        out_specs=pl.BlockSpec((1, 16, _LANES), lambda p, t: (p, 0, 0)),
        compiler_params=pltpu.CompilerParams(
            dimension_semantics=("parallel", "arbitrary")),
    )(scal, gt2d, pr2d, code2d)


# ----------------------------------------------------------------------------
# Plain-JAX glue (resizes + scene-flow projection)
# ----------------------------------------------------------------------------
def resize_bilinear_align_corners(img, oh, ow):
    b, c, h, w = img.shape
    if (oh, ow) == (h, w):
        return img
    ys = jnp.linspace(0.0, h - 1.0, oh) if oh > 1 else jnp.zeros((oh,), jnp.float32)
    xs = jnp.linspace(0.0, w - 1.0, ow) if ow > 1 else jnp.zeros((ow,), jnp.float32)
    y0f = jnp.clip(jnp.floor(ys), 0, h - 1)
    x0f = jnp.clip(jnp.floor(xs), 0, w - 1)
    y0 = y0f.astype(jnp.int32)
    x0 = x0f.astype(jnp.int32)
    y1 = jnp.minimum(y0 + 1, h - 1)
    x1 = jnp.minimum(x0 + 1, w - 1)
    wy = (ys - y0f)[:, None]
    wx = (xs - x0f)[None, :]
    r0 = img[:, :, y0, :]
    r1 = img[:, :, y1, :]
    v00 = r0[:, :, :, x0]
    v01 = r0[:, :, :, x1]
    v10 = r1[:, :, :, x0]
    v11 = r1[:, :, :, x1]
    top = v00 * (1.0 - wx) + v01 * wx
    bot = v10 * (1.0 - wx) + v11 * wx
    return top * (1.0 - wy) + bot * wy


def resize_nearest(img, oh, ow):
    b, c, h, w = img.shape
    if (oh, ow) == (h, w):
        return img
    ys = jnp.clip(jnp.floor(jnp.arange(oh) * (h / oh)).astype(jnp.int32), 0, h - 1)
    xs = jnp.clip(jnp.floor(jnp.arange(ow) * (w / ow)).astype(jnp.int32), 0, w - 1)
    return img[:, :, ys, :][:, :, :, xs]


def get_pixelgrid(b, h, w):
    gx = jnp.broadcast_to(jnp.linspace(0.0, w - 1.0, w)[None, None, None, :],
                          (b, 1, h, w))
    gy = jnp.broadcast_to(jnp.linspace(0.0, h - 1.0, h)[None, None, :, None],
                          (b, 1, h, w))
    return jnp.concatenate([gx, gy, jnp.ones_like(gx)], axis=1)


def disp2depth_kitti(disp, k_value):
    mask = (disp > 0).astype(disp.dtype)
    depth = k_value[:, None, None, None] * 0.54 / (disp + (1.0 - mask))
    return jnp.clip(depth, 1e-3, 80.0)


def pixel2pts(K, depth):
    b, _, h, w = depth.shape
    pixelgrid = get_pixelgrid(b, h, w)
    pts = jnp.matmul(jnp.linalg.inv(K), pixelgrid.reshape(b, 3, -1)) \
        * depth.reshape(b, 1, -1)
    return pts.reshape(b, 3, h, w), pixelgrid


def pts2pixel(pts, K):
    b, _, h, w = pts.shape
    proj = jnp.matmul(K, pts.reshape(b, 3, -1))
    pix = proj[:, 0:2] / (proj[:, 2:3] + 1e-8)
    return pix.reshape(b, 2, h, w)


def project_sceneflow2flow(K, sf, disp):
    b, _, h, w = disp.shape
    depth = disp2depth_kitti(disp, K[:, 0, 0])
    pts, grid = pixel2pts(K, depth)
    sf_s = resize_bilinear_align_corners(sf, h, w)
    coord = pts2pixel(pts + sf_s, K)
    return coord - grid[:, 0:2]


# ----------------------------------------------------------------------------
# Eval_MonoDepth_MODS.forward
# ----------------------------------------------------------------------------
def eval_monodepth_mods(output_dict, target_dict):
    input_l1 = target_dict["input_l1"]
    b, _, h, w = input_l1.shape
    # The reference module's unsqueeze(0)/repeat seg trick assumes batch == 1.

    seg_l1 = target_dict["seg_l1"].astype(jnp.float32)
    seg_sky = resize_nearest(seg_l1[:, 1:2], h, w)
    seg_water = resize_nearest(seg_l1[:, 0:1], h, w)
    no_sky = (seg_sky == 0.0).astype(jnp.float32)       # seg_no_sky_mask
    water = (seg_water == 1.0).astype(jnp.float32)      # seg_water_mask
    mask_code = 2.0 * no_sky + water                    # packed mask stream

    gt_disp = target_dict["disp"].astype(jnp.float32)
    # Metric path: the *w and *(t*2*w) scalings are exactly cancelled by the
    # per-map (x-mean)/std normalisation, so the raw resized maps are used.
    gt_resized = resize_bilinear_align_corners(gt_disp, h, w)

    pred0 = output_dict["disp_l1_pp"][0].astype(jnp.float32)
    pred_resized = resize_bilinear_align_corners(pred0, h, w)
    # out_disp_l_final = resize(pred) * t * 2 * w / (2 * t) = resize(pred) * w
    out_disp_l_final = pred_resized * float(w)

    fx = target_dict["input_k_l1_flip_aug"][:, 0, 0][0]

    # ---------------- lane-dense, tiled, fused reductions -------------------
    n = b * h * w
    tile_rows, num_slices, tiles_per_slice, rows_padded = _tiling(n)
    needs_mask = (rows_padded * _LANES) != n
    gt2d = _lane_dense(gt_resized, rows_padded)
    pr2d = _lane_dense(pred_resized, rows_padded)
    code2d = _lane_dense(mask_code, rows_padded)

    mom = _masked_moments(gt2d, pr2d, code2d, n, tile_rows,
                          num_slices, tiles_per_slice, needs_mask)
    nf = jnp.float32(n)
    s_g, ss_g, mn_g = jnp.sum(mom[:, 0]), jnp.sum(mom[:, 1]), jnp.min(mom[:, 2])
    s_o, ss_o, mn_o = jnp.sum(mom[:, 3]), jnp.sum(mom[:, 4]), jnp.min(mom[:, 5])
    mean_g = s_g / nf
    mean_o = s_o / nf
    std_g = jnp.sqrt(jnp.maximum((ss_g - s_g * s_g / nf) / (nf - 1.0), 0.0))
    std_o = jnp.sqrt(jnp.maximum((ss_o - s_o * s_o / nf) / (nf - 1.0), 0.0))
    istd_g = 1.0 / std_g
    istd_o = 1.0 / std_o
    delta = jnp.maximum((mn_g - mean_g) * istd_g, (mn_o - mean_o) * istd_o)
    kc = fx * 0.54
    scal = jnp.stack([mean_g, istd_g, mean_o, istd_o, delta, kc,
                      jnp.float32(0.0), jnp.float32(0.0)]).astype(jnp.float32)

    err = _masked_depth_errors(scal, gt2d, pr2d, code2d, tile_rows,
                               num_slices, tiles_per_slice)
    sums16 = jnp.sum(err, axis=(0, 2))                   # (16,)
    row_w = sums16[0:8]
    row_o = sums16[8:16]
    row_f = row_w + row_o                                # full = water + obstacle

    def _derive(row):
        cnt = row[0]
        return (row[1] / cnt, row[2] / cnt, jnp.sqrt(row[3] / cnt),
                jnp.sqrt(row[4] / cnt), row[5] / cnt, row[6] / cnt,
                row[7] / cnt)

    abs_rel, sq_rel, rms, log_rms, a1, a2, a3 = _derive(row_f)
    w_abs_rel, w_sq_rel, w_rms, w_log_rms, w_a1, w_a2, w_a3 = _derive(row_w)
    o_abs_rel, o_sq_rel, o_rms, o_log_rms, o_a1, o_a2, o_a3 = _derive(row_o)

    # ------------------- module side outputs (plain JAX) --------------------
    output_dict["out_disp_l_pp"] = out_disp_l_final
    out_sceneflow = resize_bilinear_align_corners(
        output_dict["flow_f_pp"][0].astype(jnp.float32), h, w)
    out_flow = project_sceneflow2flow(
        target_dict["input_k_l1"].astype(jnp.float32),
        out_sceneflow, out_disp_l_final)
    output_dict["out_flow_pp"] = out_flow

    return {
        "o_abs_rel": o_abs_rel, "o_sq_rel": o_sq_rel, "o_rms": o_rms,
        "o_log_rms": o_log_rms, "o_a1": o_a1, "o_a2": o_a2, "o_a3": o_a3,
        "w_abs_rel": w_abs_rel, "w_sq_rel": w_sq_rel, "w_rms": w_rms,
        "w_a1": w_a1, "w_log_rms": w_log_rms, "w_a2": w_a2, "w_a3": w_a3,
        "full_abs_rel": abs_rel, "full_sq_rel": sq_rel, "full_rms": rms,
        "full_log_rms": log_rms, "full_a1": a1, "full_a2": a2, "full_a3": a3,
    }


# ----------------------------------------------------------------------------
# Demo
# ----------------------------------------------------------------------------
if __name__ == "__main__":
    key = jax.random.PRNGKey(0)
    B, C, H, W = 1, 3, 16, 16      # full-resolution inputs
    Hs, Ws = 8, 8                  # segmentation resolution
    Hd, Wd = 8, 8                  # gt disparity / level-0 prediction resolution

    k1, k2, k3, k4, k5 = jax.random.split(key, 5)
    input_l1 = jax.random.uniform(k1, (B, C, H, W), jnp.float32)
    input_r1 = jax.random.uniform(k2, (B, C, H, W), jnp.float32)
    gt_disp = jax.random.uniform(k3, (B, 1, Hd, Wd), jnp.float32, 0.05, 0.4)
    disp_pred = jax.random.uniform(k4, (B, 1, Hd, Wd), jnp.float32, 0.05, 0.3)
    flow_pred = jax.random.uniform(k5, (B, 3, Hd, Wd), jnp.float32, -0.05, 0.05)

    # seg channel 0 = water (bottom quarter), channel 1 = sky (top quarter)
    sky_m = jnp.zeros((Hs, Ws), jnp.float32).at[:2, :].set(1.0)
    water_m = jnp.zeros((Hs, Ws), jnp.float32).at[6:, :].set(1.0)
    seg_l1 = jnp.stack([water_m, sky_m], axis=0)[None]   # (1, 2, Hs, Ws)

    K = jnp.array([[[20.0, 0.0, 8.0],
                    [0.0, 20.0, 8.0],
                    [0.0, 0.0, 1.0]]], jnp.float32)

    target_dict = {
        "input_l1": input_l1,
        "input_r1": input_r1,
        "disp": gt_disp,
        "seg_l1": seg_l1,
        "input_k_l1_flip_aug": K,
        "input_k_l1": K,
    }
    output_dict = {
        "disp_l1_pp": [disp_pred],
        "flow_f_pp": [flow_pred],
    }

    metrics = eval_monodepth_mods(output_dict, target_dict)
    metrics = jax.tree_util.tree_map(jax.block_until_ready, metrics)

    finite = all(bool(jnp.isfinite(v)) for v in metrics.values())
    finite = finite and bool(jnp.all(jnp.isfinite(output_dict["out_flow_pp"])))
    finite = finite and bool(jnp.all(jnp.isfinite(output_dict["out_disp_l_pp"])))
    assert finite, "non-finite metric or output"
    print("KERNEL_OK")
</pallas_src>

<mosaic_0001>
module attributes {stable_mosaic.version = 11 : i64} {
  func.func @_moments_kernel(%arg0: i32, %arg1: i32, %arg2: memref<8x128xf32, #tpu.memory_space<vmem>>, %arg3: memref<8x128xf32, #tpu.memory_space<vmem>>, %arg4: memref<8x128xf32, #tpu.memory_space<vmem>>, %arg5: memref<1x8x128xf32, #tpu.memory_space<vmem>>) attributes {dimension_semantics = [#tpu.dimension_semantics<parallel>, #tpu.dimension_semantics<arbitrary>], iteration_bounds = array<i64: 1, 1>, scalar_prefetch = 0 : i64, scratch_operands = 0 : i64, tpu.core_type = #tpu.core_type<tc>, window_params = [{transform_indices = @transform_0, window_bounds = array<i64: 8, 128>}, {transform_indices = @transform_1, window_bounds = array<i64: 8, 128>}, {transform_indices = @transform_2, window_bounds = array<i64: 8, 128>}, {transform_indices = @transform_3, window_bounds = array<i64: 1, 8, 128>}]} {
    %c0_i32 = arith.constant 0 : i32
    %0 = arith.cmpi eq, %arg1, %c0_i32 : i32
    %1 = arith.extui %0 : i1 to i32
    %c0_i32_0 = arith.constant 0 : i32
    %2 = arith.cmpi ne, %1, %c0_i32_0 : i32
    scf.if %2 {
      %cst_45 = arith.constant 0.000000e+00 : f32
      %78 = vector.broadcast %cst_45 : f32 to vector<1x8x128xf32>
      %c0_46 = arith.constant 0 : index
      %c0_47 = arith.constant 0 : index
      %c0_48 = arith.constant 0 : index
      %79 = vector.load %arg5[%c0_46, %c0_47, %c0_48] : memref<1x8x128xf32, #tpu.memory_space<vmem>>, vector<1x8x128xf32>
      tpu.vector_store %arg5[%c0_46, %c0_47, %c0_48], %78 {strides = array<i32>} : memref<1x8x128xf32, #tpu.memory_space<vmem>>, vector<1x8x128xf32>,
      %cst_49 = arith.constant 1.000000e+30 : f32
      %80 = vector.broadcast %cst_49 : f32 to vector<1x128xf32>
      %c0_50 = arith.constant 0 : index
      %c2_51 = arith.constant 2 : index
      %c0_52 = arith.constant 0 : index
      %81 = vector.load %arg5[%c0_50, %c2_51, %c0_52] : memref<1x8x128xf32, #tpu.memory_space<vmem>>, vector<1x1x128xf32>
      %82 = vector.shape_cast %81 : vector<1x1x128xf32> to vector<1x128xf32>
      %83 = vector.shape_cast %80 : vector<1x128xf32> to vector<1x1x128xf32>
      tpu.vector_store %arg5[%c0_50, %c2_51, %c0_52], %83 {strides = array<i32>} : memref<1x8x128xf32, #tpu.memory_space<vmem>>, vector<1x1x128xf32>,
      %c0_53 = arith.constant 0 : index
      %c5_54 = arith.constant 5 : index
      %c0_55 = arith.constant 0 : index
      %84 = vector.load %arg5[%c0_53, %c5_54, %c0_55] : memref<1x8x128xf32, #tpu.memory_space<vmem>>, vector<1x1x128xf32>
      %85 = vector.shape_cast %84 : vector<1x1x128xf32> to vector<1x128xf32>
      %86 = vector.shape_cast %80 : vector<1x128xf32> to vector<1x1x128xf32>
      tpu.vector_store %arg5[%c0_53, %c5_54, %c0_55], %86 {strides = array<i32>} : memref<1x8x128xf32, #tpu.memory_space<vmem>>, vector<1x1x128xf32>,
    } else {
    }
    %c0 = arith.constant 0 : index
    %c0_1 = arith.constant 0 : index
    %3 = vector.load %arg4[%c0, %c0_1] : memref<8x128xf32, #tpu.memory_space<vmem>>, vector<8x128xf32>
    %cst = arith.constant 1.500000e+00 : f32
    %4 = vector.broadcast %cst : f32 to vector<8x128xf32>
    %5 = arith.cmpf oge, %3, %4 : vector<8x128xf32>
    %6 = arith.extui %5 : vector<8x128xi1> to vector<8x128xi32>
    %7 = arith.sitofp %6 : vector<8x128xi32> to vector<8x128xf32>
    %c0_2 = arith.constant 0 : index
    %c0_3 = arith.constant 0 : index
    %8 = vector.load %arg2[%c0_2, %c0_3] : memref<8x128xf32, #tpu.memory_space<vmem>>, vector<8x128xf32>
    %9 = arith.mulf %8, %7 : vector<8x128xf32>
    %c0_4 = arith.constant 0 : index
    %c0_5 = arith.constant 0 : index
    %10 = vector.load %arg3[%c0_4, %c0_5] : memref<8x128xf32, #tpu.memory_space<vmem>>, vector<8x128xf32>
    %11 = arith.mulf %10, %7 : vector<8x128xf32>
    %c1_i32 = arith.constant 1 : i32
    %12 = arith.muli %arg0, %c1_i32 : i32
    %13 = arith.addi %12, %arg1 : i32
    %c1024_i32 = arith.constant 1024 : i32
    %14 = arith.muli %13, %c1024_i32 : i32
    %15 = tpu.iota {dimensions = array<i32: 0>} : vector<8x128xi32>
    %16 = tpu.iota {dimensions = array<i32: 1>} : vector<8x128xi32>
    %c128_i32 = arith.constant 128 : i32
    %17 = vector.broadcast %c128_i32 : i32 to vector<8x128xi32>
    %18 = arith.muli %15, %17 : vector<8x128xi32>
    %19 = vector.broadcast %14 : i32 to vector<8x128xi32>
    %20 = arith.addi %19, %18 : vector<8x128xi32>
    %21 = arith.addi %20, %16 : vector<8x128xi32>
    %c256_i32 = arith.constant 256 : i32
    %22 = vector.broadcast %c256_i32 : i32 to vector<8x128xi32>
    %23 = arith.cmpi slt, %21, %22 : vector<8x128xi32>
    %cst_6 = arith.constant 1.000000e+30 : f32
    %24 = vector.broadcast %cst_6 : f32 to vector<8x128xf32>
    %25 = arith.select %23, %9, %24 : vector<8x128xi1>, vector<8x128xf32>
    %cst_7 = arith.constant 1.000000e+30 : f32
    %26 = vector.broadcast %cst_7 : f32 to vector<8x128xf32>
    %27 = arith.select %23, %11, %26 : vector<8x128xi1>, vector<8x128xf32>
    %c0_8 = arith.constant 0 : index
    %c0_9 = arith.constant 0 : index
    %c0_10 = arith.constant 0 : index
    %28 = vector.load %arg5[%c0_8, %c0_9, %c0_10] : memref<1x8x128xf32, #tpu.memory_space<vmem>>, vector<1x1x128xf32>
    %29 = vector.shape_cast %28 : vector<1x1x128xf32> to vector<1x128xf32>
    %cst_11 = arith.constant dense<0.000000e+00> : vector<128xf32>
    %30 = vector.multi_reduction <add>, %9, %cst_11 [0] : vector<8x128xf32> to vector<128xf32>
    %31 = vector.shape_cast %30 : vector<128xf32> to vector<1x128xf32>
    %32 = arith.addf %29, %31 : vector<1x128xf32>
    %c0_12 = arith.constant 0 : index
    %c0_13 = arith.constant 0 : index
    %c0_14 = arith.constant 0 : index
    %33 = vector.load %arg5[%c0_12, %c0_13, %c0_14] : memref<1x8x128xf32, #tpu.memory_space<vmem>>, vector<1x1x128xf32>
    %34 = vector.shape_cast %33 : vector<1x1x128xf32> to vector<1x128xf32>
    %35 = vector.shape_cast %32 : vector<1x128xf32> to vector<1x1x128xf32>
    tpu.vector_store %arg5[%c0_12, %c0_13, %c0_14], %35 {strides = array<i32>} : memref<1x8x128xf32, #tpu.memory_space<vmem>>, vector<1x1x128xf32>,
    %c0_15 = arith.constant 0 : index
    %c1 = arith.constant 1 : index
    %c0_16 = arith.constant 0 : index
    %36 = vector.load %arg5[%c0_15, %c1, %c0_16] : memref<1x8x128xf32, #tpu.memory_space<vmem>>, vector<1x1x128xf32>
    %37 = vector.shape_cast %36 : vector<1x1x128xf32> to vector<1x128xf32>
    %38 = arith.mulf %9, %9 : vector<8x128xf32>
    %cst_17 = arith.constant dense<0.000000e+00> : vector<128xf32>
    %39 = vector.multi_reduction <add>, %38, %cst_17 [0] : vector<8x128xf32> to vector<128xf32>
    %40 = vector.shape_cast %39 : vector<128xf32> to vector<1x128xf32>
    %41 = arith.addf %37, %40 : vector<1x128xf32>
    %c0_18 = arith.constant 0 : index
    %c1_19 = arith.constant 1 : index
    %c0_20 = arith.constant 0 : index
    %42 = vector.load %arg5[%c0_18, %c1_19, %c0_20] : memref<1x8x128xf32, #tpu.memory_space<vmem>>, vector<1x1x128xf32>
    %43 = vector.shape_cast %42 : vector<1x1x128xf32> to vector<1x128xf32>
    %44 = vector.shape_cast %41 : vector<1x128xf32> to vector<1x1x128xf32>
    tpu.vector_store %arg5[%c0_18, %c1_19, %c0_20], %44 {strides = array<i32>} : memref<1x8x128xf32, #tpu.memory_space<vmem>>, vector<1x1x128xf32>,
    %c0_21 = arith.constant 0 : index
    %c2 = arith.constant 2 : index
    %c0_22 = arith.constant 0 : index
    %45 = vector.load %arg5[%c0_21, %c2, %c0_22] : memref<1x8x128xf32, #tpu.memory_space<vmem>>, vector<1x1x128xf32>
    %46 = vector.shape_cast %45 : vector<1x1x128xf32> to vector<1x128xf32>
    %cst_23 = arith.constant dense<0x7F800000> : vector<128xf32>
    %47 = vector.multi_reduction <minimumf>, %25, %cst_23 [0] : vector<8x128xf32> to vector<128xf32>
    %48 = vector.shape_cast %47 : vector<128xf32> to vector<1x128xf32>
    %49 = arith.minimumf %46, %48 : vector<1x128xf32>
    %c0_24 = arith.constant 0 : index
    %c2_25 = arith.constant 2 : index
    %c0_26 = arith.constant 0 : index
    %50 = vector.load %arg5[%c0_24, %c2_25, %c0_26] : memref<1x8x128xf32, #tpu.memory_space<vmem>>, vector<1x1x128xf32>
    %51 = vector.shape_cast %50 : vector<1x1x128xf32> to vector<1x128xf32>
    %52 = vector.shape_cast %49 : vector<1x128xf32> to vector<1x1x128xf32>
    tpu.vector_store %arg5[%c0_24, %c2_25, %c0_26], %52 {strides = array<i32>} : memref<1x8x128xf32, #tpu.memory_space<vmem>>, vector<1x1x128xf32>,
    %c0_27 = arith.constant 0 : index
    %c3 = arith.constant 3 : index
    %c0_28 = arith.constant 0 : index
    %53 = vector.load %arg5[%c0_27, %c3, %c0_28] : memref<1x8x128xf32, #tpu.memory_space<vmem>>, vector<1x1x128xf32>
    %54 = vector.shape_cast %53 : vector<1x1x128xf32> to vector<1x128xf32>
    %cst_29 = arith.constant dense<0.000000e+00> : vector<128xf32>
    %55 = vector.multi_reduction <add>, %11, %cst_29 [0] : vector<8x128xf32> to vector<128xf32>
    %56 = vector.shape_cast %55 : vector<128xf32> to vector<1x128xf32>
    %57 = arith.addf %54, %56 : vector<1x128xf32>
    %c0_30 = arith.constant 0 : index
    %c3_31 = arith.constant 3 : index
    %c0_32 = arith.constant 0 : index
    %58 = vector.load %arg5[%c0_30, %c3_31, %c0_32] : memref<1x8x128xf32, #tpu.memory_space<vmem>>, vector<1x1x128xf32>
    %59 = vector.shape_cast %58 : vector<1x1x128xf32> to vector<1x128xf32>
    %60 = vector.shape_cast %57 : vector<1x128xf32> to vector<1x1x128xf32>
    tpu.vector_store %arg5[%c0_30, %c3_31, %c0_32], %60 {strides = array<i32>} : memref<1x8x128xf32, #tpu.memory_space<vmem>>, vector<1x1x128xf32>,
    %c0_33 = arith.constant 0 : index
    %c4 = arith.constant 4 : index
    %c0_34 = arith.constant 0 : index
    %61 = vector.load %arg5[%c0_33, %c4, %c0_34] : memref<1x8x128xf32, #tpu.memory_space<vmem>>, vector<1x1x128xf32>
    %62 = vector.shape_cast %61 : vector<1x1x128xf32> to vector<1x128xf32>
    %63 = arith.mulf %11, %11 : vector<8x128xf32>
    %cst_35 = arith.constant dense<0.000000e+00> : vector<128xf32>
    %64 = vector.multi_reduction <add>, %63, %cst_35 [0] : vector<8x128xf32> to vector<128xf32>
    %65 = vector.shape_cast %64 : vector<128xf32> to vector<1x128xf32>
    %66 = arith.addf %62, %65 : vector<1x128xf32>
    %c0_36 = arith.constant 0 : index
    %c4_37 = arith.constant 4 : index
    %c0_38 = arith.constant 0 : index
    %67 = vector.load %arg5[%c0_36, %c4_37, %c0_38] : memref<1x8x128xf32, #tpu.memory_space<vmem>>, vector<1x1x128xf32>
    %68 = vector.shape_cast %67 : vector<1x1x128xf32> to vector<1x128xf32>
    %69 = vector.shape_cast %66 : vector<1x128xf32> to vector<1x1x128xf32>
    tpu.vector_store %arg5[%c0_36, %c4_37, %c0_38], %69 {strides = array<i32>} : memref<1x8x128xf32, #tpu.memory_space<vmem>>, vector<1x1x128xf32>,
    %c0_39 = arith.constant 0 : index
    %c5 = arith.constant 5 : index
    %c0_40 = arith.constant 0 : index
    %70 = vector.load %arg5[%c0_39, %c5, %c0_40] : memref<1x8x128xf32, #tpu.memory_space<vmem>>, vector<1x1x128xf32>
    %71 = vector.shape_cast %70 : vector<1x1x128xf32> to vector<1x128xf32>
    %cst_41 = arith.constant dense<0x7F800000> : vector<128xf32>
    %72 = vector.multi_reduction <minimumf>, %27, %cst_41 [0] : vector<8x128xf32> to vector<128xf32>
    %73 = vector.shape_cast %72 : vector<128xf32> to vector<1x128xf32>
    %74 = arith.minimumf %71, %73 : vector<1x128xf32>
    %c0_42 = arith.constant 0 : index
    %c5_43 = arith.constant 5 : index
    %c0_44 = arith.constant 0 : index
    %75 = vector.load %arg5[%c0_42, %c5_43, %c0_44] : memref<1x8x128xf32, #tpu.memory_space<vmem>>, vector<1x1x128xf32>
    %76 = vector.shape_cast %75 : vector<1x1x128xf32> to vector<1x128xf32>
    %77 = vector.shape_cast %74 : vector<1x128xf32> to vector<1x1x128xf32>
    tpu.vector_store %arg5[%c0_42, %c5_43, %c0_44], %77 {strides = array<i32>} : memref<1x8x128xf32, #tpu.memory_space<vmem>>, vector<1x1x128xf32>,
    return
  }
  func.func @transform_0(%arg0: i32, %arg1: i32) -> (i32, i32) {
    %c1_i32 = arith.constant 1 : i32
    %0 = arith.muli %arg0, %c1_i32 : i32
    %1 = arith.addi %0, %arg1 : i32
    %c0_i32 = arith.constant 0 : i32
    %c0_i32_0 = arith.constant 0 : i32
    return %1, %c0_i32 : i32, i32
  }
  func.func @transform_1(%arg0: i32, %arg1: i32) -> (i32, i32) {
    %c1_i32 = arith.constant 1 : i32
    %0 = arith.muli %arg0, %c1_i32 : i32
    %1 = arith.addi %0, %arg1 : i32
    %c0_i32 = arith.constant 0 : i32
    %c0_i32_0 = arith.constant 0 : i32
    return %1, %c0_i32 : i32, i32
  }
  func.func @transform_2(%arg0: i32, %arg1: i32) -> (i32, i32) {
    %c1_i32 = arith.constant 1 : i32
    %0 = arith.muli %arg0, %c1_i32 : i32
    %1 = arith.addi %0, %arg1 : i32
    %c0_i32 = arith.constant 0 : i32
    %c0_i32_0 = arith.constant 0 : i32
    return %1, %c0_i32 : i32, i32
  }
  func.func @transform_3(%arg0: i32, %arg1: i32) -> (i32, i32, i32) {
    %c0_i32 = arith.constant 0 : i32
    %c0_i32_0 = arith.constant 0 : i32
    %c0_i32_1 = arith.constant 0 : i32
    return %arg0, %c0_i32, %c0_i32_0 : i32, i32, i32
  }
}

</mosaic_0001>

<llo_original>
// kernel: tpu_custom_call.1
$region0: #{tpu_custom_call.1}
  #allocation0 [shape = 'u32[]', space=smem, size = 0x4, offset = 0x4, fixed_abs, tag = 'smem constant byte address 0x4 - core index']
  #allocation1 [shape = 'u32[144,128]{1,0:T(1,128)}', space=vmem, size = 0x12000, scoped, tag = 'internal scratch']
  %s0 = inlined_call_operand.hbm [shape: f32[8,128], index: 0, kind: input, shape index: {}]
  %s1 = inlined_call_operand.hbm [shape: f32[8,128], index: 1, kind: input, shape index: {}]
  %s2 = inlined_call_operand.hbm [shape: f32[8,128], index: 2, kind: input, shape index: {}]
  %s3 = inlined_call_operand.hbm [shape: f32[1,8,128], index: 3, kind: output, shape index: {}]
  %s4 = sld [smem:[#allocation0]]
  $region38: #{tpu_custom_call.1} parent=0
    _
  %s6 = ssub.s32 1, %s4
  %s7 = scalar_select 0, %s6, %s4
  $region1: #{tpu_custom_call.1} parent=0
    #allocation2 [shape = 'u8[4096]{0}', space=vmem, size = 0x1000, scoped, tag = 'input window, operand 0, single buffered']
    #allocation3 [shape = 's32[1]{0}', space=sflag, size = 0x4, scoped, tag = 'scoped memory for tpu_custom_call.1']
    #allocation4 [shape = 's32[1]{0}', space=sflag, size = 0x4, scoped, tag = 'scoped memory for tpu_custom_call.1']
    #allocation5 [shape = 'u8[4096]{0}', space=vmem, size = 0x1000, scoped, tag = 'input window, operand 1, single buffered']
    #allocation6 [shape = 's32[1]{0}', space=sflag, size = 0x4, scoped, tag = 'scoped memory for tpu_custom_call.1']
    #allocation7 [shape = 'u8[4096]{0}', space=vmem, size = 0x1000, scoped, tag = 'input window, operand 2, single buffered']
    #allocation8 [shape = 'u8[4096]{0}', space=vmem, size = 0x1000, scoped, tag = 'output window, operand 0, single buffered']
    %8 = vsyncpa [#allocation3], 0
    %9 = vsyncpa [#allocation6], 0
    %10 = vsyncpa [#allocation4], 0
    // Predicated region
    $region2: #{tpu_custom_call.1} parent=1 // pred_check
      _
    $region3: #{tpu_custom_call.1} parent=1 // pred_check_branch
      %12 = sbr.rel (0) target = $region5
    $region4: #{tpu_custom_call.1} parent=1 // pred_region
      %s13 = sadd.s32 0, 0
      %s15 = ssub.s32 128, 128
      %16 = vsyncadd [#allocation3], %s15
      %s17 = smul.addr %s13, 128
      %s18 = scalar_lea.hbm %s0, %s17
      %s20 = sshll.u32 [#allocation2], 4
      %s21 = int_to_ptr.vmem [resolvable:$true] %s20
      %23 = dma.hbm_to_vmem [thread:$0]  %s18, 128, %s21, [#allocation3]
    $region5: #{tpu_custom_call.1} parent=1 // pred_fallthru
      _
    // Predicated region
    $region6: #{tpu_custom_call.1} parent=1 // pred_check
      _
    $region7: #{tpu_custom_call.1} parent=1 // pred_check_branch
      %25 = sbr.rel (0) target = $region9
    $region8: #{tpu_custom_call.1} parent=1 // pred_region
      %s26 = sadd.s32 0, 0
      %s28 = ssub.s32 128, 128
      %29 = vsyncadd [#allocation6], %s28
      %s30 = smul.addr %s26, 128
      %s31 = scalar_lea.hbm %s1, %s30
      %s33 = sshll.u32 [#allocation5], 4
      %s34 = int_to_ptr.vmem [resolvable:$true] %s33
      %36 = dma.hbm_to_vmem [thread:$0]  %s31, 128, %s34, [#allocation6]
    $region9: #{tpu_custom_call.1} parent=1 // pred_fallthru
      _
    // Predicated region
    $region10: #{tpu_custom_call.1} parent=1 // pred_check
      _
    $region11: #{tpu_custom_call.1} parent=1 // pred_check_branch
      %38 = sbr.rel (0) target = $region13
    $region12: #{tpu_custom_call.1} parent=1 // pred_region
      %s39 = sadd.s32 0, 0
      %s41 = ssub.s32 128, 128
      %42 = vsyncadd [#allocation6], %s41
      %s43 = smul.addr %s39, 128
      %s44 = scalar_lea.hbm %s2, %s43
      %s46 = sshll.u32 [#allocation7], 4
      %s47 = int_to_ptr.vmem [resolvable:$true] %s46
      %49 = dma.hbm_to_vmem [thread:$0]  %s44, 128, %s47, [#allocation6]
    $region13: #{tpu_custom_call.1} parent=1 // pred_fallthru
      _
    // Predicated region
    $region14: #{tpu_custom_call.1} parent=1 // pred_check
      _
    $region15: #{tpu_custom_call.1} parent=1 // pred_check_branch
      %51 = sbr.rel (0) target = $region17
    $region16: #{tpu_custom_call.1} parent=1 // pred_region
      %52 = dma.done [#allocation3], 128
    $region17: #{tpu_custom_call.1} parent=1 // pred_fallthru
      _
    // Predicated region
    $region18: #{tpu_custom_call.1} parent=1 // pred_check
      _
    $region19: #{tpu_custom_call.1} parent=1 // pred_check_branch
      %54 = sbr.rel (0) target = $region21
    $region20: #{tpu_custom_call.1} parent=1 // pred_region
      %55 = dma.done [#allocation6], 128
    $region21: #{tpu_custom_call.1} parent=1 // pred_fallthru
      _
    // Predicated region
    $region22: #{tpu_custom_call.1} parent=1 // pred_check
      _
    $region23: #{tpu_custom_call.1} parent=1 // pred_check_branch
      %57 = sbr.rel (0) target = $region25
    $region24: #{tpu_custom_call.1} parent=1 // pred_region
      %58 = dma.done [#allocation6], 128
    $region25: #{tpu_custom_call.1} parent=1 // pred_fallthru
      _
    %s59 = sadd.s32 0, 0
    %s60 = sadd.s32 0, 0
    %s61 = sadd.s32 0, 0
    %p62 = scmp.eq.s32.totalorder 0, 0
    // Predicated region
    $region26: #{tpu_custom_call.1} parent=1 // pred_check
      %p63 = pneg %p62
    $region27: #{tpu_custom_call.1} parent=1 // pred_check_branch
      %65 = sbr.rel (%p63) target = $region29
    $region28: #{tpu_custom_call.1} parent=1 // pred_region
      %66 = vst [vmem:[#allocation8] sm:$0xff] 0.0
      %67 = vst [vmem:[#allocation8 + $0x2] sm:$0x1] 1e+30
      %68 = vst [vmem:[#allocation8 + $0x5] sm:$0x1] 1e+30
    $region29: #{tpu_custom_call.1} parent=1 // pred_fallthru
      _
    %v69 = vld [vmem:[#allocation7] sm:$0xff]
    %vm70 = vcmp.ge.f32.partialorder %v69, 1.5
    %v71 = vsel %vm70, 1, 0
    %v72 = vcvt.s32.f32 %v71
    %v73 = vld [vmem:[#allocation2] sm:$0xff]
    %v74 = vmul.f32 %v73, %v72
    %v75 = vld [vmem:[#allocation5] sm:$0xff]
    %v76 = vmul.f32 %v75, %v72
    %s77 = sadd.s32 0, 0
    %s78 = smul.u32 %s77, 1024
    %v79 = vlaneseq
    %v80 = vshrl.u32 %v79, 7
    %v81 = vlaneseq
    %v82 = vand.u32 %v81, 127
    %v83 = vmul.u32 %v80, 128
    %v84 = vstv %s78
    %v85 = vadd.s32 %v84, %v83
    %v86 = vadd.s32 %v85, %v82
    %vm87 = vcmp.lt.s32.totalorder %v86, 256
    %v88 = vsel %vm87, %v74, 1e+30
    %v89 = vsel %vm87, %v76, 1e+30
    %v90 = vld [vmem:[#allocation8] sm:$0x1]
    %v91 = vrot.slane %v74, 4
    %v92 = vadd.f32 %v74, %v91
    %v93 = vrot.slane %v92, 2
    %v94 = vadd.f32 %v92, %v93
    %v95 = vrot.slane %v94, 1
    %v96 = vadd.f32 %v94, %v95
    %v97 = vadd.f32 %v90, %v96
    %98 = vst [vmem:[#allocation8] sm:$0x1] %v97
    %v99 = vld [vmem:[#allocation8 + $0x1] sm:$0x1]
    %v100 = vmul.f32 %v74, %v74
    %v101 = vrot.slane %v100, 4
    %v102 = vadd.f32 %v100, %v101
    %v103 = vrot.slane %v102, 2
    %v104 = vadd.f32 %v102, %v103
    %v105 = vrot.slane %v104, 1
    %v106 = vadd.f32 %v104, %v105
    %v107 = vadd.f32 %v99, %v106
    %108 = vst [vmem:[#allocation8 + $0x1] sm:$0x1] %v107
    %v109 = vld [vmem:[#allocation8 + $0x2] sm:$0x1]
    %v110 = vrot.slane %v88, 4
    %v111 = vmin.f32 %v88, %v110
    %v112 = vrot.slane %v111, 2
    %v113 = vmin.f32 %v111, %v112
    %v114 = vrot.slane %v113, 1
    %v115 = vmin.f32 %v113, %v114
    %v116 = vmin.f32 %v109, %v115
    %117 = vst [vmem:[#allocation8 + $0x2] sm:$0x1] %v116
    %v118 = vld [vmem:[#allocation8 + $0x3] sm:$0x1]
    %v119 = vrot.slane %v76, 4
    %v120 = vadd.f32 %v76, %v119
    %v121 = vrot.slane %v120, 2
    %v122 = vadd.f32 %v120, %v121
    %v123 = vrot.slane %v122, 1
    %v124 = vadd.f32 %v122, %v123
    %v125 = vadd.f32 %v118, %v124
    %126 = vst [vmem:[#allocation8 + $0x3] sm:$0x1] %v125
    %v127 = vld [vmem:[#allocation8 + $0x4] sm:$0x1]
    %v128 = vmul.f32 %v76, %v76
    %v129 = vrot.slane %v128, 4
    %v130 = vadd.f32 %v128, %v129
    %v131 = vrot.slane %v130, 2
    %v132 = vadd.f32 %v130, %v131
    %v133 = vrot.slane %v132, 1
    %v134 = vadd.f32 %v132, %v133
    %v135 = vadd.f32 %v127, %v134
    %136 = vst [vmem:[#allocation8 + $0x4] sm:$0x1] %v135
    %v137 = vld [vmem:[#allocation8 + $0x5] sm:$0x1]
    %v138 = vrot.slane %v89, 4
    %v139 = vmin.f32 %v89, %v138
    %v140 = vrot.slane %v139, 2
    %v141 = vmin.f32 %v139, %v140
    %v142 = vrot.slane %v141, 1
    %v143 = vmin.f32 %v141, %v142
    %v144 = vmin.f32 %v137, %v143
    %145 = vst [vmem:[#allocation8 + $0x5] sm:$0x1] %v144
    // Predicated region
    $region30: #{tpu_custom_call.1} parent=1 // pred_check
      _
    $region31: #{tpu_custom_call.1} parent=1 // pred_check_branch
      %147 = sbr.rel (0) target = $region33
    $region32: #{tpu_custom_call.1} parent=1 // pred_region
      %s149 = ssub.s32 128, 128
      %150 = vsyncadd [#allocation4], %s149
      %s152 = sshll.u32 [#allocation8], 4
      %s153 = int_to_ptr.vmem [resolvable:$true] %s152
      %155 = dma.vmem_to_hbm [thread:$0]  %s153, 128, %s3, [#allocation4]
    $region33: #{tpu_custom_call.1} parent=1 // pred_fallthru
      _
    // Predicated region
    $region34: #{tpu_custom_call.1} parent=1 // pred_check
      _
    $region35: #{tpu_custom_call.1} parent=1 // pred_check_branch
      %157 = sbr.rel (0) target = $region37
    $region36: #{tpu_custom_call.1} parent=1 // pred_region
      %158 = dma.done [#allocation4], 128
    $region37: #{tpu_custom_call.1} parent=1 // pred_fallthru
      _
    %159 = vsyncpa [#allocation3], 1
    %160 = vsyncpa [#allocation6], 1
    %161 = vsyncpa [#allocation4], 1

</llo_original>
